<compile_context>
chip_gen: v7x
topology: tpu7x:2x2x1
jax: 0.10.0
libtpu: 0.0.40
codegen_flags: <defaults>
</compile_context>

<pallas_src>
import functools

import jax
import jax.numpy as jnp
from jax.experimental import pallas as pl
from jax.experimental.pallas import tpu as pltpu


def _layernorm_kernel(x_ref, gamma_ref, beta_ref, o_ref, *, eps, affine, n_elems):
    # x_ref: (TILE_N, D) -- TILE_N samples, each flattened to D = C*H*W elems.
    x = x_ref[...].astype(jnp.float32)

    # Fused single-pass reduction: sum and sum-of-squares per sample (row).
    s = jnp.sum(x, axis=1, keepdims=True)          # (TILE_N, 1)
    sq = jnp.sum(x * x, axis=1, keepdims=True)     # (TILE_N, 1)

    mean = s * (1.0 / n_elems)
    # torch .std(1) default is unbiased: divide by (n - 1)
    var = (sq - s * mean) * (1.0 / (n_elems - 1))
    var = jnp.maximum(var, 0.0)                    # guard f32 cancellation
    std = jnp.sqrt(var)

    # Per-row scalar reciprocal (TILE_N values) -> element path is mul/add only.
    inv = 1.0 / (std + eps)                        # (TILE_N, 1)

    y = (x - mean) * inv
    if affine:
        y = y * gamma_ref[...].astype(jnp.float32) + beta_ref[...].astype(jnp.float32)
    o_ref[...] = y.astype(o_ref.dtype)


def _pick_tile_n(n, row_bytes, target_bytes=1 << 20):
    """Largest sample-tile with block <= ~target_bytes; multiple of 8 or == n."""
    tile = max(1, target_bytes // max(row_bytes, 1))
    if tile >= n:
        return n
    tile = max(8, (tile // 8) * 8)   # sublane dim must be a multiple of 8
    return n if tile >= n else tile


def layer_norm(x, gamma=None, beta=None, *, eps=1e-8, affine=True):
    """x: (N, C, *spatial). gamma/beta: (C,). Returns same shape as x."""
    N = x.shape[0]
    C = x.shape[1]
    spatial = 1
    for d in x.shape[2:]:
        spatial *= d
    D = C * spatial

    # Flatten each sample to a single lane-dense row.
    x2 = x.reshape(N, D)

    if affine:
        g2 = jnp.repeat(gamma.astype(x.dtype), spatial).reshape(1, D)
        b2 = jnp.repeat(beta.astype(x.dtype), spatial).reshape(1, D)
    else:
        g2 = jnp.ones((1, D), x.dtype)
        b2 = jnp.zeros((1, D), x.dtype)

    itemsize = jnp.dtype(x.dtype).itemsize
    tile_n = _pick_tile_n(N, D * itemsize)
    grid = (pl.cdiv(N, tile_n),)

    # TODO(synk): for very large per-sample sizes (D*4 bytes >> a few MiB, e.g.
    # C=256, H=W=128) add a two-pass HW-split reduction so blocks fit v7x's
    # 64 MiB VMEM; not needed at these shapes.

    kernel = functools.partial(
        _layernorm_kernel, eps=eps, affine=affine, n_elems=D
    )

    cost = pl.CostEstimate(
        flops=7 * N * D,
        transcendentals=N,
        bytes_accessed=2 * N * D * itemsize + 2 * D * itemsize,
    )

    out = pl.pallas_call(
        kernel,
        out_shape=jax.ShapeDtypeStruct((N, D), x.dtype),
        grid_spec=pltpu.PrefetchScalarGridSpec(
            num_scalar_prefetch=0,
            grid=grid,
            in_specs=[
                pl.BlockSpec((tile_n, D), lambda i: (i, 0)),
                pl.BlockSpec((1, D), lambda i: (0, 0)),
                pl.BlockSpec((1, D), lambda i: (0, 0)),
            ],
            out_specs=pl.BlockSpec((tile_n, D), lambda i: (i, 0)),
        ),
        compiler_params=pltpu.CompilerParams(
            dimension_semantics=("parallel",),
        ),
        cost_estimate=cost,
    )(x2, g2, b2)

    return out.reshape(x.shape)


if __name__ == "__main__":
    key = jax.random.PRNGKey(0)
    kx, kg = jax.random.split(key)

    N, C, H, W = 2, 4, 16, 16
    x = jax.random.normal(kx, (N, C, H, W), dtype=jnp.float32)

    # deterministic param init matching nn.Module __init__:
    # gamma ~ uniform[0,1), beta = zeros
    gamma = jax.random.uniform(kg, (C,), dtype=jnp.float32)
    beta = jnp.zeros((C,), dtype=jnp.float32)

    eps = 1e-8
    y = layer_norm(x, gamma, beta, eps=eps, affine=True)
    y = jax.block_until_ready(y)

    # reference (plain JAX) matching the PyTorch module semantics
    xf = x.reshape(N, -1)
    mean = xf.mean(axis=1).reshape(N, 1, 1, 1)
    std = jnp.sqrt(((xf - xf.mean(axis=1, keepdims=True)) ** 2).sum(axis=1)
                   / (xf.shape[1] - 1)).reshape(N, 1, 1, 1)
    ref = (x - mean) / (std + eps)
    ref = ref * gamma.reshape(1, C, 1, 1) + beta.reshape(1, C, 1, 1)

    assert jnp.allclose(y, ref, atol=1e-5, rtol=1e-5), "mismatch vs reference"
    print("KERNEL_OK")
</pallas_src>

<mosaic_0001>
module attributes {stable_mosaic.version = 11 : i64} {
  func.func @_layernorm_kernel(%arg0: i32, %arg1: memref<2x1024xf32, #tpu.memory_space<vmem>>, %arg2: memref<1x1024xf32, #tpu.memory_space<vmem>>, %arg3: memref<1x1024xf32, #tpu.memory_space<vmem>>, %arg4: memref<2x1024xf32, #tpu.memory_space<vmem>>) attributes {dimension_semantics = [#tpu.dimension_semantics<parallel>], iteration_bounds = array<i64: 1>, scalar_prefetch = 0 : i64, scratch_operands = 0 : i64, tpu.core_type = #tpu.core_type<tc>, window_params = [{transform_indices = @transform_0, window_bounds = array<i64: 2, 1024>}, {pipeline_mode = #tpu.pipeline_mode<synchronous>, transform_indices = @transform_1, window_bounds = array<i64: 1, 1024>}, {pipeline_mode = #tpu.pipeline_mode<synchronous>, transform_indices = @transform_2, window_bounds = array<i64: 1, 1024>}, {transform_indices = @transform_3, window_bounds = array<i64: 2, 1024>}]} {
    %c0 = arith.constant 0 : index
    %c0_0 = arith.constant 0 : index
    %0 = vector.load %arg1[%c0, %c0_0] : memref<2x1024xf32, #tpu.memory_space<vmem>>, vector<2x1024xf32>
    %cst = arith.constant dense<0.000000e+00> : vector<2xf32>
    %1 = vector.multi_reduction <add>, %0, %cst [1] : vector<2x1024xf32> to vector<2xf32>
    %2 = vector.shape_cast %1 : vector<2xf32> to vector<2x1xf32>
    %3 = arith.mulf %0, %0 : vector<2x1024xf32>
    %cst_1 = arith.constant dense<0.000000e+00> : vector<2xf32>
    %4 = vector.multi_reduction <add>, %3, %cst_1 [1] : vector<2x1024xf32> to vector<2xf32>
    %5 = vector.shape_cast %4 : vector<2xf32> to vector<2x1xf32>
    %cst_2 = arith.constant 9.765625E-4 : f32
    %6 = vector.broadcast %cst_2 : f32 to vector<2x1xf32>
    %7 = arith.mulf %2, %6 : vector<2x1xf32>
    %8 = arith.mulf %2, %7 : vector<2x1xf32>
    %9 = arith.subf %5, %8 : vector<2x1xf32>
    %cst_3 = arith.constant 9.77517105E-4 : f32
    %10 = vector.broadcast %cst_3 : f32 to vector<2x1xf32>
    %11 = arith.mulf %9, %10 : vector<2x1xf32>
    %cst_4 = arith.constant 0.000000e+00 : f32
    %12 = vector.broadcast %cst_4 : f32 to vector<2x1xf32>
    %13 = arith.maximumf %11, %12 : vector<2x1xf32>
    %14 = math.sqrt %13 : vector<2x1xf32>
    %cst_5 = arith.constant 9.99999993E-9 : f32
    %15 = vector.broadcast %cst_5 : f32 to vector<2x1xf32>
    %16 = arith.addf %14, %15 : vector<2x1xf32>
    %cst_6 = arith.constant 1.000000e+00 : f32
    %17 = vector.broadcast %cst_6 : f32 to vector<2x1xf32>
    %18 = arith.divf %17, %16 : vector<2x1xf32>
    %19 = vector.broadcast %7 : vector<2x1xf32> to vector<2x1024xf32>
    %20 = arith.subf %0, %19 : vector<2x1024xf32>
    %21 = vector.broadcast %18 : vector<2x1xf32> to vector<2x1024xf32>
    %22 = arith.mulf %20, %21 : vector<2x1024xf32>
    %c0_7 = arith.constant 0 : index
    %c0_8 = arith.constant 0 : index
    %23 = vector.load %arg2[%c0_7, %c0_8] : memref<1x1024xf32, #tpu.memory_space<vmem>>, vector<1x1024xf32>
    %24 = vector.broadcast %23 : vector<1x1024xf32> to vector<2x1024xf32>
    %25 = arith.mulf %22, %24 : vector<2x1024xf32>
    %c0_9 = arith.constant 0 : index
    %c0_10 = arith.constant 0 : index
    %26 = vector.load %arg3[%c0_9, %c0_10] : memref<1x1024xf32, #tpu.memory_space<vmem>>, vector<1x1024xf32>
    %27 = vector.broadcast %26 : vector<1x1024xf32> to vector<2x1024xf32>
    %28 = arith.addf %25, %27 : vector<2x1024xf32>
    %c0_11 = arith.constant 0 : index
    %c0_12 = arith.constant 0 : index
    %29 = vector.load %arg4[%c0_11, %c0_12] : memref<2x1024xf32, #tpu.memory_space<vmem>>, vector<2x1024xf32>
    tpu.vector_store %arg4[%c0_11, %c0_12], %28 {strides = array<i32>} : memref<2x1024xf32, #tpu.memory_space<vmem>>, vector<2x1024xf32>,
    return
  }
  func.func @transform_0(%arg0: i32) -> (i32, i32) {
    %c0_i32 = arith.constant 0 : i32
    %c0_i32_0 = arith.constant 0 : i32
    return %arg0, %c0_i32 : i32, i32
  }
  func.func @transform_1(%arg0: i32) -> (i32, i32) {
    %c0_i32 = arith.constant 0 : i32
    %c0_i32_0 = arith.constant 0 : i32
    %c0_i32_1 = arith.constant 0 : i32
    return %c0_i32, %c0_i32_0 : i32, i32
  }
  func.func @transform_2(%arg0: i32) -> (i32, i32) {
    %c0_i32 = arith.constant 0 : i32
    %c0_i32_0 = arith.constant 0 : i32
    %c0_i32_1 = arith.constant 0 : i32
    return %c0_i32, %c0_i32_0 : i32, i32
  }
  func.func @transform_3(%arg0: i32) -> (i32, i32) {
    %c0_i32 = arith.constant 0 : i32
    %c0_i32_0 = arith.constant 0 : i32
    return %arg0, %c0_i32 : i32, i32
  }
}

</mosaic_0001>

<llo_original>
// kernel: tpu_custom_call.1
$region0: #{tpu_custom_call.1}
  #allocation0 [shape = 'u32[]', space=smem, size = 0x4, offset = 0x4, fixed_abs, tag = 'smem constant byte address 0x4 - core index']
  #allocation1 [shape = 'u32[144,128]{1,0:T(1,128)}', space=vmem, size = 0x12000, scoped, tag = 'internal scratch']
  %s0 = inlined_call_operand.hbm [shape: f32[2,1024], index: 0, kind: input, shape index: {}]
  %s1 = inlined_call_operand.hbm [shape: f32[1,1024], index: 1, kind: input, shape index: {}]
  %s2 = inlined_call_operand.hbm [shape: f32[1,1024], index: 2, kind: input, shape index: {}]
  %s3 = inlined_call_operand.hbm [shape: f32[2,1024], index: 3, kind: output, shape index: {}]
  %s4 = sld [smem:[#allocation0]]
  $region34: #{tpu_custom_call.1} parent=0
    _
  %s6 = ssub.s32 1, %s4
  %s7 = scalar_select 0, %s6, %s4
  $region1: #{tpu_custom_call.1} parent=0
    #allocation2 [shape = 'u8[8192]{0}', space=vmem, size = 0x2000, scoped, tag = 'input window, operand 0, single buffered']
    #allocation3 [shape = 's32[1]{0}', space=sflag, size = 0x4, scoped, tag = 'scoped memory for tpu_custom_call.1']
    #allocation4 [shape = 's32[1]{0}', space=sflag, size = 0x4, scoped, tag = 'scoped memory for tpu_custom_call.1']
    #allocation5 [shape = 'u8[4096]{0}', space=vmem, size = 0x1000, scoped, tag = 'input window, operand 1, single buffered']
    #allocation6 [shape = 's32[1]{0}', space=sflag, size = 0x4, scoped, tag = 'scoped memory for tpu_custom_call.1']
    #allocation7 [shape = 'u8[4096]{0}', space=vmem, size = 0x1000, scoped, tag = 'input window, operand 2, single buffered']
    #allocation8 [shape = 'u8[8192]{0}', space=vmem, size = 0x2000, scoped, tag = 'output window, operand 0, single buffered']
    %8 = vsyncpa [#allocation3], 0
    %9 = vsyncpa [#allocation6], 0
    %10 = vsyncpa [#allocation4], 0
    // Predicated region
    $region2: #{tpu_custom_call.1} parent=1 // pred_check
      _
    $region3: #{tpu_custom_call.1} parent=1 // pred_check_branch
      %12 = sbr.rel (0) target = $region5
    $region4: #{tpu_custom_call.1} parent=1 // pred_region
      %s14 = ssub.s32 256, 256
      %15 = vsyncadd [#allocation3], %s14
      %s17 = sshll.u32 [#allocation2], 4
      %s18 = int_to_ptr.vmem [resolvable:$true] %s17
      %20 = dma.hbm_to_vmem [thread:$0]  %s0, 256, %s18, [#allocation3]
    $region5: #{tpu_custom_call.1} parent=1 // pred_fallthru
      _
    // Predicated region
    $region6: #{tpu_custom_call.1} parent=1 // pred_check
      _
    $region7: #{tpu_custom_call.1} parent=1 // pred_check_branch
      %22 = sbr.rel (0) target = $region9
    $region8: #{tpu_custom_call.1} parent=1 // pred_region
      %s24 = ssub.s32 128, 128
      %25 = vsyncadd [#allocation6], %s24
      %s27 = sshll.u32 [#allocation5], 4
      %s28 = int_to_ptr.vmem [resolvable:$true] %s27
      %30 = dma.hbm_to_vmem [thread:$0]  %s1, 128, %s28, [#allocation6]
    $region9: #{tpu_custom_call.1} parent=1 // pred_fallthru
      _
    // Predicated region
    $region10: #{tpu_custom_call.1} parent=1 // pred_check
      _
    $region11: #{tpu_custom_call.1} parent=1 // pred_check_branch
      %32 = sbr.rel (0) target = $region13
    $region12: #{tpu_custom_call.1} parent=1 // pred_region
      %s34 = ssub.s32 128, 128
      %35 = vsyncadd [#allocation6], %s34
      %s37 = sshll.u32 [#allocation7], 4
      %s38 = int_to_ptr.vmem [resolvable:$true] %s37
      %40 = dma.hbm_to_vmem [thread:$0]  %s2, 128, %s38, [#allocation6]
    $region13: #{tpu_custom_call.1} parent=1 // pred_fallthru
      _
    // Predicated region
    $region14: #{tpu_custom_call.1} parent=1 // pred_check
      _
    $region15: #{tpu_custom_call.1} parent=1 // pred_check_branch
      %42 = sbr.rel (0) target = $region17
    $region16: #{tpu_custom_call.1} parent=1 // pred_region
      %43 = dma.done [#allocation3], 256
    $region17: #{tpu_custom_call.1} parent=1 // pred_fallthru
      _
    // Predicated region
    $region18: #{tpu_custom_call.1} parent=1 // pred_check
      _
    $region19: #{tpu_custom_call.1} parent=1 // pred_check_branch
      %45 = sbr.rel (0) target = $region21
    $region20: #{tpu_custom_call.1} parent=1 // pred_region
      %46 = dma.done [#allocation6], 128
    $region21: #{tpu_custom_call.1} parent=1 // pred_fallthru
      _
    // Predicated region
    $region22: #{tpu_custom_call.1} parent=1 // pred_check
      _
    $region23: #{tpu_custom_call.1} parent=1 // pred_check_branch
      %48 = sbr.rel (0) target = $region25
    $region24: #{tpu_custom_call.1} parent=1 // pred_region
      %49 = dma.done [#allocation6], 128
    $region25: #{tpu_custom_call.1} parent=1 // pred_fallthru
      _
    %v50 = vld [vmem:[#allocation2] sm:$0xff]
    %v51 = vld [vmem:[#allocation2 + $0x8] sm:$0xff]
    %v54 = vcombine.high %v50, %v50
    %v56 = vunpack.c.l.s4 1983009808
    %v57 = vunpack.c.0.s8 %v56
    %v58 = vlaneseq
    %v59 = vshrl.u32 %v58, 7
    %v60 = vsub.s32 %v57, %v59
    %v61 = vrot.slane %v50, %v60
    %v63 = vunpack.c.l.s4 1983009808
    %v64 = vunpack.c.0.s8 %v63
    %v65 = vlaneseq
    %v66 = vshrl.u32 %v65, 7
    %v67 = vsub.s32 %v64, %v66
    %v68 = vrot.slane %v54, %v67
    %v69 = vcombine.high %v61, %v61
    %v70 = vcombine.high %v68, %v68
    %v71 = vcombine.high %v51, %v51
    %v73 = vunpack.c.l.s4 1983009808
    %v74 = vunpack.c.0.s8 %v73
    %v75 = vlaneseq
    %v76 = vshrl.u32 %v75, 7
    %v77 = vsub.s32 %v74, %v76
    %v78 = vrot.slane %v51, %v77
    %v80 = vunpack.c.l.s4 1983009808
    %v81 = vunpack.c.0.s8 %v80
    %v82 = vlaneseq
    %v83 = vshrl.u32 %v82, 7
    %v84 = vsub.s32 %v81, %v83
    %v85 = vrot.slane %v71, %v84
    %v86 = vcombine.high %v78, %v78
    %v87 = vcombine.high %v85, %v85
    %vm96 = vcmask 1041408
    %v97 = vsel %vm96, %v61, 0.0
    %v98 = vsel %vm96, %v69, 0.0
    %v99 = vadd.f32 %v97, %v98
    %v100 = vsel %vm96, %v68, 0.0
    %v101 = vadd.f32 %v99, %v100
    %v102 = vsel %vm96, %v70, 0.0
    %v103 = vadd.f32 %v101, %v102
    %v104 = vsel %vm96, %v78, 0.0
    %v105 = vadd.f32 %v103, %v104
    %v106 = vsel %vm96, %v86, 0.0
    %v107 = vadd.f32 %v105, %v106
    %v108 = vsel %vm96, %v85, 0.0
    %v109 = vadd.f32 %v107, %v108
    %v110 = vsel %vm96, %v87, 0.0
    %v111 = vadd.f32 %v109, %v110
    %112 = vadd.xlane.f32.xlu0 %v111
    %v113 = vpop.xlane.xlu0 %112
    %v114 = vmul.f32 %v50, %v50
    %v115 = vmul.f32 %v51, %v51
    %v118 = vcombine.high %v114, %v114
    %v120 = vunpack.c.l.s4 1983009808
    %v121 = vunpack.c.0.s8 %v120
    %v122 = vlaneseq
    %v123 = vshrl.u32 %v122, 7
    %v124 = vsub.s32 %v121, %v123
    %v125 = vrot.slane %v114, %v124
    %v127 = vunpack.c.l.s4 1983009808
    %v128 = vunpack.c.0.s8 %v127
    %v129 = vlaneseq
    %v130 = vshrl.u32 %v129, 7
    %v131 = vsub.s32 %v128, %v130
    %v132 = vrot.slane %v118, %v131
    %v133 = vcombine.high %v125, %v125
    %v134 = vcombine.high %v132, %v132
    %v135 = vcombine.high %v115, %v115
    %v137 = vunpack.c.l.s4 1983009808
    %v138 = vunpack.c.0.s8 %v137
    %v139 = vlaneseq
    %v140 = vshrl.u32 %v139, 7
    %v141 = vsub.s32 %v138, %v140
    %v142 = vrot.slane %v115, %v141
    %v144 = vunpack.c.l.s4 1983009808
    %v145 = vunpack.c.0.s8 %v144
    %v146 = vlaneseq
    %v147 = vshrl.u32 %v146, 7
    %v148 = vsub.s32 %v145, %v147
    %v149 = vrot.slane %v135, %v148
    %v150 = vcombine.high %v142, %v142
    %v151 = vcombine.high %v149, %v149
    %v160 = vsel %vm96, %v125, 0.0
    %v161 = vsel %vm96, %v133, 0.0
    %v162 = vadd.f32 %v160, %v161
    %v163 = vsel %vm96, %v132, 0.0
    %v164 = vadd.f32 %v162, %v163
    %v165 = vsel %vm96, %v134, 0.0
    %v166 = vadd.f32 %v164, %v165
    %v167 = vsel %vm96, %v142, 0.0
    %v168 = vadd.f32 %v166, %v167
    %v169 = vsel %vm96, %v150, 0.0
    %v170 = vadd.f32 %v168, %v169
    %v171 = vsel %vm96, %v149, 0.0
    %v172 = vadd.f32 %v170, %v171
    %v173 = vsel %vm96, %v151, 0.0
    %v174 = vadd.f32 %v172, %v173
    %175 = vadd.xlane.f32.xlu0 %v174
    %v176 = vpop.xlane.xlu0 %175
    %v177 = vmul.f32 %v113, 0.0009765625
    %v178 = vmul.f32 %v113, %v177
    %v179 = vsub.f32 %v176, %v178
    %v180 = vmul.f32 %v179, 0.0009775171
    %v181 = vmax.f32 %v180, 0.0
    %v182 = vrsqrt.pop %v181
    %v183 = vmul.f32 %v181, %v182
    %vm184 = vcmp.eq.f32.partialorder %v181, inf
    %v185 = vsel %vm184, %v181, %v183
    %vm186 = vcmp.eq.f32.partialorder %v181, 0.0
    %v187 = vand.u32 %v181, 2147483648
    %v188 = vsel %vm186, %v187, %v185
    %v189 = vadd.f32 %v188, 1e-08
    %v190 = vrcp.pop %v189
    %v191 = vmul.f32 1.0, %v190
    %v194 = vunpack.c.l.s4 269488144
    %v195 = vunpack.c.0.s8 %v194
    %v196 = vlaneseq
    %v197 = vshrl.u32 %v196, 7
    %v198 = vsub.s32 %v195, %v197
    %v199 = vrot.slane %v177, %v198
    %v201 = vsub.f32 %v50, %v199
    %v202 = vsub.f32 %v51, %v199
    %v205 = vunpack.c.l.s4 269488144
    %v206 = vunpack.c.0.s8 %v205
    %v207 = vlaneseq
    %v208 = vshrl.u32 %v207, 7
    %v209 = vsub.s32 %v206, %v208
    %v210 = vrot.slane %v191, %v209
    %v212 = vmul.f32 %v201, %v210
    %v213 = vmul.f32 %v202, %v210
    %v214 = vld [vmem:[#allocation5] sm:$0xff]
    %v216 = vlaneseq
    %v217 = vshrl.u32 %v216, 7
    %v218 = vsub.s32 0, %v217
    %v219 = vrot.slane %v214, %v218
    %v220 = vlaneseq
    %v221 = vshrl.u32 %v220, 7
    %v222 = vsub.s32 1, %v221
    %v223 = vrot.slane %v214, %v222
    %v224 = vlaneseq
    %v225 = vshrl.u32 %v224, 7
    %v226 = vsub.s32 2, %v225
    %v227 = vrot.slane %v214, %v226
    %v228 = vlaneseq
    %v229 = vshrl.u32 %v228, 7
    %v230 = vsub.s32 3, %v229
    %v231 = vrot.slane %v214, %v230
    %v232 = vlaneseq
    %v233 = vshrl.u32 %v232, 7
    %v234 = vsub.s32 4, %v233
    %v235 = vrot.slane %v214, %v234
    %v236 = vlaneseq
    %v237 = vshrl.u32 %v236, 7
    %v238 = vsub.s32 5, %v237
    %v239 = vrot.slane %v214, %v238
    %v240 = vlaneseq
    %v241 = vshrl.u32 %v240, 7
    %v242 = vsub.s32 6, %v241
    %v243 = vrot.slane %v214, %v242
    %v244 = vlaneseq
    %v245 = vshrl.u32 %v244, 7
    %v246 = vsub.s32 7, %v245
    %v247 = vrot.slane %v214, %v246
    %v248 = vcombine.low %v219, %v223
    %v249 = vcombine.low %v227, %v231
    %v251 = vunpack.c.l.s4 1983009808
    %v252 = vunpack.c.0.s8 %v251
    %v253 = vlaneseq
    %v254 = vshrl.u32 %v253, 7
    %v255 = vsub.s32 %v252, %v254
    %v256 = vrot.slane %v248, %v255
    %v258 = vunpack.c.l.s4 1983009808
    %v259 = vunpack.c.0.s8 %v258
    %v260 = vlaneseq
    %v261 = vshrl.u32 %v260, 7
    %v262 = vsub.s32 %v259, %v261
    %v263 = vrot.slane %v249, %v262
    %v264 = vcombine.low %v256, %v263
    %v265 = vcombine.low %v235, %v239
    %v266 = vcombine.low %v243, %v247
    %v268 = vunpack.c.l.s4 1983009808
    %v269 = vunpack.c.0.s8 %v268
    %v270 = vlaneseq
    %v271 = vshrl.u32 %v270, 7
    %v272 = vsub.s32 %v269, %v271
    %v273 = vrot.slane %v265, %v272
    %v275 = vunpack.c.l.s4 1983009808
    %v276 = vunpack.c.0.s8 %v275
    %v277 = vlaneseq
    %v278 = vshrl.u32 %v277, 7
    %v279 = vsub.s32 %v276, %v278
    %v280 = vrot.slane %v266, %v279
    %v281 = vcombine.low %v273, %v280
    %v284 = vmul.f32 %v212, %v264
    %v285 = vmul.f32 %v213, %v281
    %v286 = vld [vmem:[#allocation7] sm:$0xff]
    %v288 = vlaneseq
    %v289 = vshrl.u32 %v288, 7
    %v290 = vsub.s32 0, %v289
    %v291 = vrot.slane %v286, %v290
    %v292 = vlaneseq
    %v293 = vshrl.u32 %v292, 7
    %v294 = vsub.s32 1, %v293
    %v295 = vrot.slane %v286, %v294
    %v296 = vlaneseq
    %v297 = vshrl.u32 %v296, 7
    %v298 = vsub.s32 2, %v297
    %v299 = vrot.slane %v286, %v298
    %v300 = vlaneseq
    %v301 = vshrl.u32 %v300, 7
    %v302 = vsub.s32 3, %v301
    %v303 = vrot.slane %v286, %v302
    %v304 = vlaneseq
    %v305 = vshrl.u32 %v304, 7
    %v306 = vsub.s32 4, %v305
    %v307 = vrot.slane %v286, %v306
    %v308 = vlaneseq
    %v309 = vshrl.u32 %v308, 7
    %v310 = vsub.s32 5, %v309
    %v311 = vrot.slane %v286, %v310
    %v312 = vlaneseq
    %v313 = vshrl.u32 %v312, 7
    %v314 = vsub.s32 6, %v313
    %v315 = vrot.slane %v286, %v314
    %v316 = vlaneseq
    %v317 = vshrl.u32 %v316, 7
    %v318 = vsub.s32 7, %v317
    %v319 = vrot.slane %v286, %v318
    %v320 = vcombine.low %v291, %v295
    %v321 = vcombine.low %v299, %v303
    %v323 = vunpack.c.l.s4 1983009808
    %v324 = vunpack.c.0.s8 %v323
    %v325 = vlaneseq
    %v326 = vshrl.u32 %v325, 7
    %v327 = vsub.s32 %v324, %v326
    %v328 = vrot.slane %v320, %v327
    %v330 = vunpack.c.l.s4 1983009808
    %v331 = vunpack.c.0.s8 %v330
    %v332 = vlaneseq
    %v333 = vshrl.u32 %v332, 7
    %v334 = vsub.s32 %v331, %v333
    %v335 = vrot.slane %v321, %v334
    %v336 = vcombine.low %v328, %v335
    %v337 = vcombine.low %v307, %v311
    %v338 = vcombine.low %v315, %v319
    %v340 = vunpack.c.l.s4 1983009808
    %v341 = vunpack.c.0.s8 %v340
    %v342 = vlaneseq
    %v343 = vshrl.u32 %v342, 7
    %v344 = vsub.s32 %v341, %v343
    %v345 = vrot.slane %v337, %v344
    %v347 = vunpack.c.l.s4 1983009808
    %v348 = vunpack.c.0.s8 %v347
    %v349 = vlaneseq
    %v350 = vshrl.u32 %v349, 7
    %v351 = vsub.s32 %v348, %v350
    %v352 = vrot.slane %v338, %v351
    %v353 = vcombine.low %v345, %v352
    %v356 = vadd.f32 %v284, %v336
    %v357 = vadd.f32 %v285, %v353
    %358 = vst [vmem:[#allocation8] sm:$0xff] %v356
    %359 = vst [vmem:[#allocation8 + $0x8] sm:$0xff] %v357
    // Predicated region
    $region26: #{tpu_custom_call.1} parent=1 // pred_check
      _
    $region27: #{tpu_custom_call.1} parent=1 // pred_check_branch
      %361 = sbr.rel (0) target = $region29
    $region28: #{tpu_custom_call.1} parent=1 // pred_region
      %s363 = ssub.s32 256, 256
      %364 = vsyncadd [#allocation4], %s363
      %s366 = sshll.u32 [#allocation8], 4
      %s367 = int_to_ptr.vmem [resolvable:$true] %s366
      %369 = dma.vmem_to_hbm [thread:$0]  %s367, 256, %s3, [#allocation4]
    $region29: #{tpu_custom_call.1} parent=1 // pred_fallthru
      _
    // Predicated region
    $region30: #{tpu_custom_call.1} parent=1 // pred_check
      _
    $region31: #{tpu_custom_call.1} parent=1 // pred_check_branch
      %371 = sbr.rel (0) target = $region33
    $region32: #{tpu_custom_call.1} parent=1 // pred_region
      %372 = dma.done [#allocation4], 256
    $region33: #{tpu_custom_call.1} parent=1 // pred_fallthru
      _
    %373 = vsyncpa [#allocation3], 1
    %374 = vsyncpa [#allocation6], 1
    %375 = vsyncpa [#allocation4], 1

</llo_original>
